<compile_context>
chip_gen: v6e
topology: v6e:2x2x1
jax: 0.10.0
libtpu: 0.0.40
codegen_flags: <defaults>
</compile_context>

<pallas_src>
import jax
import jax.numpy as jnp
from jax.experimental import pallas as pl
from jax.experimental.pallas import tpu as pltpu


def _round_up(x, m):
    return ((x + m - 1) // m) * m


def _vmem_limit_bytes():
    """Generation-aware VMEM budget (≈75% of physical, capped at 96 MiB)."""
    phys = 64 * 1024 * 1024  # safe minimum (v7x); v5e/v6e have 128 MiB
    try:
        info = pltpu.get_tpu_info()
        phys = int(getattr(info, "vmem_capacity_bytes", phys))
    except Exception:
        pass
    return min((phys * 3) // 4, 96 * 1024 * 1024)


def _num_tensorcores():
    """Best-effort TensorCores-per-chip query (v7x has 2); defaults to 1."""
    try:
        info = pltpu.get_tpu_info()
        for attr in ("num_cores", "tensorcores_per_chip", "num_tensorcores",
                     "cores_per_chip"):
            v = getattr(info, attr, None)
            if v:
                return int(v)
    except Exception:
        pass
    return 1


def _choose_tile(dim, target, align, min_tile):
    """Pick (tile, padded_dim). Prefers a divisor tile (no padding needed)."""
    target = max(align, (target // align) * align)
    min_tile = max(align, min_tile)
    if dim <= target:
        t = _round_up(dim, align)
        return t, t
    t = target
    while t >= min_tile:               # largest aligned divisor <= target
        if dim % t == 0:
            return t, dim
        t -= align
    return target, _round_up(dim, target)   # fallback: pad to tile multiple


# ----------------------------------------------------------------------------
# Single-block kernel: whole v, W, c, h resident in VMEM. One dot + bias +
# sigmoid; no grid, no accumulator init/finalize branches.
# ----------------------------------------------------------------------------
def _rbm_single_block_kernel(v_ref, w_ref, c_ref, h_ref):
    logits = jnp.dot(v_ref[...], w_ref[...],
                     preferred_element_type=jnp.float32)
    h_ref[...] = jax.nn.sigmoid(logits + c_ref[...])


# ----------------------------------------------------------------------------
# Tiled kernel: grid = (B/tm, H/tn, V/tk); reduction (K) axis last.
# Accumulates directly into the resident f32 output block.
# ----------------------------------------------------------------------------
def _rbm_tiled_kernel(v_ref, w_ref, c_ref, h_ref):
    k = pl.program_id(2)

    @pl.when(k == 0)
    def _():
        h_ref[...] = jnp.zeros_like(h_ref)

    h_ref[...] += jnp.dot(v_ref[...], w_ref[...],
                          preferred_element_type=jnp.float32)

    @pl.when(k == pl.num_programs(2) - 1)
    def _():
        h_ref[...] = jax.nn.sigmoid(h_ref[...] + c_ref[...])


def rbm_forward(batch_data, w, c, *,
                tm=512, tn=2048, tk=2048,
                dot_dtype=jnp.bfloat16,
                single_block_bytes=20 * 1024 * 1024,
                w_buffers=2):
    """h = sigmoid(batch_data @ w + c).

    batch_data: (B, V), w: (V, H), c: (1, H) -> (B, H) f32.
    Dot operands are streamed in `dot_dtype` (default bf16) with f32
    accumulation; bias + sigmoid are applied in f32.  Pass pre-cast bf16
    arrays (the model caches W in bf16) to avoid per-call casts.
    """
    B, V = batch_data.shape
    V2, H = w.shape
    assert V == V2 and c.shape == (1, H)

    itemsize = jnp.dtype(dot_dtype).itemsize
    # Only cast when the caller hasn't already (model caches bf16 W / f32 c).
    v_in = batch_data if batch_data.dtype == dot_dtype else batch_data.astype(dot_dtype)
    w_in = w if w.dtype == dot_dtype else w.astype(dot_dtype)
    c_in = c if c.dtype == jnp.float32 else c.astype(jnp.float32)

    vmem_limit = _vmem_limit_bytes()
    bytes_accessed = (B * V + V * H) * itemsize + H * 4 + B * H * 4
    cost = pl.CostEstimate(flops=2 * B * V * H,
                           transcendentals=B * H,
                           bytes_accessed=bytes_accessed)

    # ---------------- fast path: one block, no grid -------------------------
    if bytes_accessed <= min(single_block_bytes, vmem_limit // 2):
        return pl.pallas_call(
            _rbm_single_block_kernel,
            out_shape=jax.ShapeDtypeStruct((B, H), jnp.float32),
            in_specs=[
                pl.BlockSpec(memory_space=pltpu.MemorySpace.VMEM),
                pl.BlockSpec(memory_space=pltpu.MemorySpace.VMEM),
                pl.BlockSpec(memory_space=pltpu.MemorySpace.VMEM),
            ],
            out_specs=pl.BlockSpec(memory_space=pltpu.MemorySpace.VMEM),
            compiler_params=pltpu.CompilerParams(
                vmem_limit_bytes=vmem_limit),
            cost_estimate=cost,
        )(v_in, w_in, c_in)

    # ---------------- general path: (M, N, K) tiled grid --------------------
    # Prefer divisor tiles (no padding); fall back to padding for odd shapes.
    # bf16 sublane packing -> M tile multiple of 16; lane dims multiples of 128.
    tm, Bp = _choose_tile(B, tm, 16, max(64, tm // 4))
    tn, Hp = _choose_tile(H, tn, 128, max(256, tn // 4))
    tk, Vp = _choose_tile(V, tk, 128, max(256, tk // 4))

    # Keep >= 2 parallel (M, N) blocks on multi-TensorCore chips (v7x).
    if _num_tensorcores() >= 2 and (Bp // tm) * (Hp // tn) < 2:
        if tn >= 256 and (tn // 2) % 128 == 0 and Hp % (tn // 2) == 0:
            tn //= 2
        elif tm >= 32 and (tm // 2) % 16 == 0 and Bp % (tm // 2) == 0:
            tm //= 2

    # Correctness fallback: zero-pad (K padding must be zero-filled so the
    # accumulation stays exact).
    if (Bp, Vp) != (B, V):
        v_in = jnp.pad(v_in, ((0, Bp - B), (0, Vp - V)))
    if (Vp, Hp) != (V, H):
        w_in = jnp.pad(w_in, ((0, Vp - V), (0, Hp - H)))
    if Hp != H:
        c_in = jnp.pad(c_in, ((0, 0), (0, Hp - H)))

    grid = (Bp // tm, Hp // tn, Vp // tk)

    # Optional deeper pipelining of the streamed weight tile (DMA-latency-
    # bound cases only); default (2) uses the plain BlockSpec.
    if w_buffers is not None and w_buffers != 2:
        w_spec = pl.BlockSpec((tk, tn), lambda i, j, k: (k, j),
                              pipeline_mode=pl.Buffered(w_buffers))
    else:
        w_spec = pl.BlockSpec((tk, tn), lambda i, j, k: (k, j))

    out = pl.pallas_call(
        _rbm_tiled_kernel,
        out_shape=jax.ShapeDtypeStruct((Bp, Hp), jnp.float32),
        grid_spec=pltpu.PrefetchScalarGridSpec(
            num_scalar_prefetch=0,
            grid=grid,
            in_specs=[
                pl.BlockSpec((tm, tk), lambda i, j, k: (i, k)),   # visible tile
                w_spec,                                           # weight tile
                pl.BlockSpec((1, tn), lambda i, j, k: (0, j)),    # bias tile
            ],
            out_specs=pl.BlockSpec((tm, tn), lambda i, j, k: (i, j)),
        ),
        compiler_params=pltpu.CompilerParams(
            dimension_semantics=("parallel", "parallel", "arbitrary"),
            vmem_limit_bytes=vmem_limit,
        ),
        cost_estimate=cost,
    )(v_in, w_in, c_in)

    if (Bp, Hp) != (B, H):
        out = out[:B, :H]
    return out


class ModelBasePallas:
    """Mirror of ModelBase's constructor signature; forward is the RBM pass."""

    name = "rbm_base"

    def __init__(self, optimizer=None, lr=1e-3, device="tpu",
                 n_visible=256, n_hidden=128, key=None):
        self.network = None
        self.optimizer = optimizer
        self.lr = lr
        self.device = device
        if key is None:
            key = jax.random.PRNGKey(0)
        kw, _ = jax.random.split(key)
        # Deterministic parameter init (shapes implied by RBM: W (V,H), c (1,H)).
        self.w = (jax.random.normal(kw, (n_visible, n_hidden), jnp.float32)
                  * 0.01)
        self.c = jnp.zeros((1, n_hidden), jnp.float32)
        # Cast once and cache — avoids a full HBM f32->bf16 pass over W per call.
        self.w_lo = self.w.astype(jnp.bfloat16)

    def forward(self, batch_data, cond=None):
        return rbm_forward(batch_data, self.w_lo, self.c)

    def get_information(self):
        return (f"\nmodels info:\nname            :{self.name}"
                f"\nlr              :{self.lr}"
                f"\ndevice          :{self.device}\n")

    def __repr__(self):
        return self.get_information()


if __name__ == "__main__":
    key = jax.random.PRNGKey(0)
    k_data, k_model = jax.random.split(key)

    B, V, H = 8, 256, 128
    batch_data = (jax.random.uniform(k_data, (B, V), jnp.float32) > 0.5
                  ).astype(jnp.float32)

    model = ModelBasePallas(optimizer=None, lr=1e-3, device="tpu",
                            n_visible=V, n_hidden=H, key=k_model)

    # Plain-JAX f32 reference (kernel uses bf16 operands, f32 accumulation —
    # intentional precision choice; tolerance 1e-2).
    ref = jax.nn.sigmoid(batch_data @ model.w + model.c)

    # 1) Fast path: single-block kernel (small shapes fit VMEM).
    h_fast = jax.block_until_ready(model.forward(batch_data))
    assert h_fast.shape == (B, H)
    assert jnp.allclose(h_fast, ref, atol=1e-2, rtol=1e-2), "single-block mismatch"

    # 2) Tiled path: force it (single_block_bytes=0) with a small K tile so the
    #    reduction grid axis has >1 step; validates init/accumulate/finalize
    #    and the padding fallback (B=8 -> padded to 16 rows).
    h_tiled = jax.block_until_ready(
        rbm_forward(batch_data, model.w_lo, model.c,
                    tm=512, tn=128, tk=128, single_block_bytes=0))
    assert h_tiled.shape == (B, H)
    assert jnp.allclose(h_tiled, ref, atol=1e-2, rtol=1e-2), "tiled mismatch"

    print("KERNEL_OK")
</pallas_src>

<mosaic_0001>
module attributes {stable_mosaic.version = 11 : i64} {
  func.func @_rbm_single_block_kernel(%arg0: memref<8x256xbf16, #tpu.memory_space<vmem>>, %arg1: memref<256x128xbf16, #tpu.memory_space<vmem>>, %arg2: memref<1x128xf32, #tpu.memory_space<vmem>>, %arg3: memref<8x128xf32, #tpu.memory_space<vmem>>) attributes {dimension_semantics = [], scalar_prefetch = 0 : i64, scratch_operands = 0 : i64, tpu.core_type = #tpu.core_type<tc>} {
    %c0 = arith.constant 0 : index
    %c0_0 = arith.constant 0 : index
    %0 = vector.load %arg0[%c0, %c0_0] : memref<8x256xbf16, #tpu.memory_space<vmem>>, vector<8x256xbf16>
    %c0_1 = arith.constant 0 : index
    %c0_2 = arith.constant 0 : index
    %1 = vector.load %arg1[%c0_1, %c0_2] : memref<256x128xbf16, #tpu.memory_space<vmem>>, vector<256x128xbf16>
    %cst = arith.constant dense<0.000000e+00> : vector<8x128xf32>
    %2 = tpu.matmul %0, %1, %cst {dimension_numbers = #tpu.dot_dimension_numbers<[1], [0], [0], [1], [0, 0, 1, 1], [], []>} : vector<8x256xbf16>, vector<256x128xbf16>, vector<8x128xf32> -> vector<8x128xf32>
    %c0_3 = arith.constant 0 : index
    %c0_4 = arith.constant 0 : index
    %3 = vector.load %arg2[%c0_3, %c0_4] : memref<1x128xf32, #tpu.memory_space<vmem>>, vector<1x128xf32>
    %4 = vector.broadcast %3 : vector<1x128xf32> to vector<8x128xf32>
    %5 = arith.addf %2, %4 : vector<8x128xf32>
    %6 = arith.negf %5 : vector<8x128xf32>
    %7 = math.exp %6 : vector<8x128xf32>
    %cst_5 = arith.constant 1.000000e+00 : f32
    %8 = vector.broadcast %cst_5 : f32 to vector<8x128xf32>
    %9 = arith.addf %8, %7 : vector<8x128xf32>
    %10 = arith.divf %8, %9 : vector<8x128xf32>
    %c0_6 = arith.constant 0 : index
    %c0_7 = arith.constant 0 : index
    %11 = vector.load %arg3[%c0_6, %c0_7] : memref<8x128xf32, #tpu.memory_space<vmem>>, vector<8x128xf32>
    tpu.vector_store %arg3[%c0_6, %c0_7], %10 {strides = array<i32>} : memref<8x128xf32, #tpu.memory_space<vmem>>, vector<8x128xf32>,
    return
  }
}

</mosaic_0001>

<llo_original>
// kernel: tpu_custom_call.1
$region0: #{tpu_custom_call.1}
  #allocation0 [shape = 'u32[]', space=smem, size = 0x4, offset = 0x4, fixed_abs, tag = 'smem constant byte address 0x4 - core index']
  #allocation1 [shape = 'u32[144,128]{1,0:T(1,128)}', space=vmem, size = 0x12000, scoped, tag = 'internal scratch']
  %s0 = inlined_call_operand.hbm [shape: bf16[8,256], index: 0, kind: input, shape index: {}]
  %s1 = inlined_call_operand.hbm [shape: bf16[256,128], index: 1, kind: input, shape index: {}]
  %s2 = inlined_call_operand.vmem [shape: f32[1,128], index: 2, kind: input, shape index: {}]
  %s3 = inlined_call_operand.hbm [shape: f32[8,128], index: 3, kind: output, shape index: {}]
  %s4 = sld [smem:[#allocation0]]
  $region30: #{tpu_custom_call.1} parent=0
    _
  %s6 = ssub.s32 1, %s4
  %s7 = scalar_select 0, %s6, %s4
  $region1: #{tpu_custom_call.1} parent=0
    #allocation2 [shape = 'u8[4096]{0}', space=vmem, size = 0x1000, scoped, tag = 'input window, operand 0, single buffered']
    #allocation3 [shape = 's32[1]{0}', space=sflag, size = 0x4, scoped, tag = 'scoped memory for tpu_custom_call.1']
    #allocation4 [shape = 's32[1]{0}', space=sflag, size = 0x4, scoped, tag = 'scoped memory for tpu_custom_call.1']
    #allocation5 [shape = 'u8[65536]{0}', space=vmem, size = 0x10000, scoped, tag = 'input window, operand 1, single buffered']
    #allocation6 [shape = 's32[1]{0}', space=sflag, size = 0x4, scoped, tag = 'scoped memory for tpu_custom_call.1']
    #allocation7 [shape = 'u8[4096]{0}', space=vmem, size = 0x1000, scoped, tag = 'output window, operand 0, single buffered']
    %8 = vsyncpa [#allocation3], 0
    %9 = vsyncpa [#allocation6], 0
    %10 = vsyncpa [#allocation4], 0
    // Predicated region
    $region2: #{tpu_custom_call.1} parent=1 // pred_check
      _
    $region3: #{tpu_custom_call.1} parent=1 // pred_check_branch
      %12 = sbr.rel (0) target = $region5
    $region4: #{tpu_custom_call.1} parent=1 // pred_region
      %s14 = ssub.s32 128, 128
      %15 = vsyncadd [#allocation3], %s14
      %s17 = sshll.u32 [#allocation2], 4
      %s18 = int_to_ptr.vmem [resolvable:$true] %s17
      %20 = dma.hbm_to_vmem [thread:$0]  %s0, 128, %s18, [#allocation3]
    $region5: #{tpu_custom_call.1} parent=1 // pred_fallthru
      _
    // Predicated region
    $region6: #{tpu_custom_call.1} parent=1 // pred_check
      _
    $region7: #{tpu_custom_call.1} parent=1 // pred_check_branch
      %22 = sbr.rel (0) target = $region9
    $region8: #{tpu_custom_call.1} parent=1 // pred_region
      %s24 = ssub.s32 2048, 2048
      %25 = vsyncadd [#allocation6], %s24
      %s26 = sshll.u32 [#allocation5], 4
      %s27 = int_to_ptr.vmem [resolvable:$true] %s26
      %32 = dma.hbm_to_vmem [thread:$0]  %s1, 2048, %s27, [#allocation6], 64, 64, 4
    $region9: #{tpu_custom_call.1} parent=1 // pred_fallthru
      _
    // Predicated region
    $region10: #{tpu_custom_call.1} parent=1 // pred_check
      _
    $region11: #{tpu_custom_call.1} parent=1 // pred_check_branch
      %34 = sbr.rel (0) target = $region13
    $region12: #{tpu_custom_call.1} parent=1 // pred_region
      _
    $region13: #{tpu_custom_call.1} parent=1 // pred_fallthru
      _
    // Predicated region
    $region14: #{tpu_custom_call.1} parent=1 // pred_check
      _
    $region15: #{tpu_custom_call.1} parent=1 // pred_check_branch
      %36 = sbr.rel (0) target = $region17
    $region16: #{tpu_custom_call.1} parent=1 // pred_region
      %37 = dma.done [#allocation3], 128
    $region17: #{tpu_custom_call.1} parent=1 // pred_fallthru
      _
    // Predicated region
    $region18: #{tpu_custom_call.1} parent=1 // pred_check
      _
    $region19: #{tpu_custom_call.1} parent=1 // pred_check_branch
      %39 = sbr.rel (0) target = $region21
    $region20: #{tpu_custom_call.1} parent=1 // pred_region
      %40 = dma.done [#allocation6], 2048
    $region21: #{tpu_custom_call.1} parent=1 // pred_fallthru
      _
    %v42 = vld [vmem:[#allocation2] sm:$0xff]
    %v43 = vld [vmem:[#allocation5] sm:$0xf]
    %v44 = vld [vmem:[#allocation5 + $0x4] sm:$0xf]
    %v45 = vld [vmem:[#allocation5 + $0x8] sm:$0xf]
    %v46 = vld [vmem:[#allocation5 + $0xc] sm:$0xf]
    %v47 = vld [vmem:[#allocation5 + $0x10] sm:$0xf]
    %v48 = vld [vmem:[#allocation5 + $0x14] sm:$0xf]
    %v49 = vld [vmem:[#allocation5 + $0x18] sm:$0xf]
    %v50 = vld [vmem:[#allocation5 + $0x1c] sm:$0xf]
    %v51 = vld [vmem:[#allocation5 + $0x20] sm:$0xf]
    %v52 = vld [vmem:[#allocation5 + $0x24] sm:$0xf]
    %v53 = vld [vmem:[#allocation5 + $0x28] sm:$0xf]
    %v54 = vld [vmem:[#allocation5 + $0x2c] sm:$0xf]
    %v55 = vld [vmem:[#allocation5 + $0x30] sm:$0xf]
    %v56 = vld [vmem:[#allocation5 + $0x34] sm:$0xf]
    %v57 = vld [vmem:[#allocation5 + $0x38] sm:$0xf]
    %v58 = vld [vmem:[#allocation5 + $0x3c] sm:$0xf]
    %v59 = vld [vmem:[#allocation5 + $0x40] sm:$0xf]
    %v60 = vld [vmem:[#allocation5 + $0x44] sm:$0xf]
    %v61 = vld [vmem:[#allocation5 + $0x48] sm:$0xf]
    %v62 = vld [vmem:[#allocation5 + $0x4c] sm:$0xf]
    %v63 = vld [vmem:[#allocation5 + $0x50] sm:$0xf]
    %v64 = vld [vmem:[#allocation5 + $0x54] sm:$0xf]
    %v65 = vld [vmem:[#allocation5 + $0x58] sm:$0xf]
    %v66 = vld [vmem:[#allocation5 + $0x5c] sm:$0xf]
    %v67 = vld [vmem:[#allocation5 + $0x60] sm:$0xf]
    %v68 = vld [vmem:[#allocation5 + $0x64] sm:$0xf]
    %v69 = vld [vmem:[#allocation5 + $0x68] sm:$0xf]
    %v70 = vld [vmem:[#allocation5 + $0x6c] sm:$0xf]
    %v71 = vld [vmem:[#allocation5 + $0x70] sm:$0xf]
    %v72 = vld [vmem:[#allocation5 + $0x74] sm:$0xf]
    %v73 = vld [vmem:[#allocation5 + $0x78] sm:$0xf]
    %v74 = vld [vmem:[#allocation5 + $0x7c] sm:$0xf]
    %v75 = vld [vmem:[%s2] sm:$0x1]
    %v77 = vlaneseq
    %v78 = vshrl.u32 %v77, 7
    %v79 = vsub.s32 0, %v78
    %v80 = vrot.slane %v75, %v79
    %v83 = vunpack.c.l.b16 %v42
    %v84 = vunpack.c.h.b16 %v42
    %v85 = vpack.c.b16 %v83, %v83
    %v86 = vpack.c.b16 %v84, %v84
    %v121 = vunpack.c.l.b16 %v43
    %v122 = vunpack.c.l.b16 %v44
    %v123 = vunpack.c.l.b16 %v45
    %v124 = vunpack.c.l.b16 %v46
    %v125 = vunpack.c.l.b16 %v47
    %v126 = vunpack.c.l.b16 %v48
    %v127 = vunpack.c.l.b16 %v49
    %v128 = vunpack.c.l.b16 %v50
    %v129 = vunpack.c.l.b16 %v51
    %v130 = vunpack.c.l.b16 %v52
    %v131 = vunpack.c.l.b16 %v53
    %v132 = vunpack.c.l.b16 %v54
    %v133 = vunpack.c.l.b16 %v55
    %v134 = vunpack.c.l.b16 %v56
    %v135 = vunpack.c.l.b16 %v57
    %v136 = vunpack.c.l.b16 %v58
    %v137 = vunpack.c.l.b16 %v59
    %v138 = vunpack.c.l.b16 %v60
    %v139 = vunpack.c.l.b16 %v61
    %v140 = vunpack.c.l.b16 %v62
    %v141 = vunpack.c.l.b16 %v63
    %v142 = vunpack.c.l.b16 %v64
    %v143 = vunpack.c.l.b16 %v65
    %v144 = vunpack.c.l.b16 %v66
    %v145 = vunpack.c.l.b16 %v67
    %v146 = vunpack.c.l.b16 %v68
    %v147 = vunpack.c.l.b16 %v69
    %v148 = vunpack.c.l.b16 %v70
    %v149 = vunpack.c.l.b16 %v71
    %v150 = vunpack.c.l.b16 %v72
    %v151 = vunpack.c.l.b16 %v73
    %v152 = vunpack.c.l.b16 %v74
    %v153 = vpack.c.b16 %v122, %v121
    %v154 = vpack.c.b16 %v124, %v123
    %v155 = vpack.c.b16 %v126, %v125
    %v156 = vpack.c.b16 %v128, %v127
    %v157 = vpack.c.b16 %v130, %v129
    %v158 = vpack.c.b16 %v132, %v131
    %v159 = vpack.c.b16 %v134, %v133
    %v160 = vpack.c.b16 %v136, %v135
    %v161 = vpack.c.b16 %v138, %v137
    %v162 = vpack.c.b16 %v140, %v139
    %v163 = vpack.c.b16 %v142, %v141
    %v164 = vpack.c.b16 %v144, %v143
    %v165 = vpack.c.b16 %v146, %v145
    %v166 = vpack.c.b16 %v148, %v147
    %v167 = vpack.c.b16 %v150, %v149
    %v168 = vpack.c.b16 %v152, %v151
    %185 = vmatprep.subr.bf16.mxu0 0
    %186 = vmatpush1.bf16.msra.mxu0 %v160
    %187 = vmatprep.subr.bf16.mxu0 0
    %188 = vmatpush1.bf16.msra.mxu0 %v159
    %189 = vmatprep.subr.bf16.mxu0 0
    %190 = vmatpush1.bf16.msra.mxu0 %v158
    %191 = vmatprep.subr.bf16.mxu0 0
    %192 = vmatpush1.bf16.msra.mxu0 %v157
    %193 = vmatprep.subr.bf16.mxu0 0
    %194 = vmatpush1.bf16.msra.mxu0 %v156
    %195 = vmatprep.subr.bf16.mxu0 0
    %196 = vmatpush1.bf16.msra.mxu0 %v155
    %197 = vmatprep.subr.bf16.mxu0 0
    %198 = vmatpush1.bf16.msra.mxu0 %v154
    %199 = vmatprep.subr.bf16.mxu0 0
    %200 = vmatpush1.bf16.msra.mxu0 %v153
    %201 = vmatprep.subr.bf16.mxu0 0
    %202 = vmatpush2.bf16.msra.mxu0 %v168
    %203 = vmatprep.subr.bf16.mxu0 0
    %204 = vmatpush2.bf16.msra.mxu0 %v167
    %205 = vmatprep.subr.bf16.mxu0 0
    %206 = vmatpush2.bf16.msra.mxu0 %v166
    %207 = vmatprep.subr.bf16.mxu0 0
    %208 = vmatpush2.bf16.msra.mxu0 %v165
    %209 = vmatprep.subr.bf16.mxu0 0
    %210 = vmatpush2.bf16.msra.mxu0 %v164
    %211 = vmatprep.subr.bf16.mxu0 0
    %212 = vmatpush2.bf16.msra.mxu0 %v163
    %213 = vmatprep.subr.bf16.mxu0 0
    %214 = vmatpush2.bf16.msra.mxu0 %v162
    %215 = vmatprep.subr.bf16.mxu0 0
    %216 = vmatpush2.bf16.msra.mxu0 %v161
    %217 = vmatprep.mubr.bf16.mxu0 %v86
    %218 = vmatmul.mubr.bf16.gmra.mxu0 %v85
    %v219 = vpop.f32.mrf.mxu0
    %v220 = vadd.f32 %v80, %v219
    %v221 = vpop.f32.mrf.mxu0
    %v222 = vpop.f32.mrf.mxu0
    %v223 = vpop.f32.mrf.mxu0
    %224 = vdwg.mxu0
    %v225 = vxor.u32 %v220, 2147483648
    %v226 = vmul.f32 %v225, 1.442695
    %v227 = vpow.pop %v226
    %v228 = vadd.f32 %v227, 1.0
    %v229 = vrcp.pop %v228
    %v230 = vmul.f32 1.0, %v229
    %231 = vst [vmem:[#allocation7] sm:$0xff] %v230
    // Predicated region
    $region22: #{tpu_custom_call.1} parent=1 // pred_check
      _
    $region23: #{tpu_custom_call.1} parent=1 // pred_check_branch
      %233 = sbr.rel (0) target = $region25
    $region24: #{tpu_custom_call.1} parent=1 // pred_region
      %s235 = ssub.s32 128, 128
      %236 = vsyncadd [#allocation4], %s235
      %s238 = sshll.u32 [#allocation7], 4
      %s239 = int_to_ptr.vmem [resolvable:$true] %s238
      %241 = dma.vmem_to_hbm [thread:$0]  %s239, 128, %s3, [#allocation4]
    $region25: #{tpu_custom_call.1} parent=1 // pred_fallthru
      _
    // Predicated region
    $region26: #{tpu_custom_call.1} parent=1 // pred_check
      _
    $region27: #{tpu_custom_call.1} parent=1 // pred_check_branch
      %243 = sbr.rel (0) target = $region29
    $region28: #{tpu_custom_call.1} parent=1 // pred_region
      %244 = dma.done [#allocation4], 128
    $region29: #{tpu_custom_call.1} parent=1 // pred_fallthru
      _
    %245 = vsyncpa [#allocation3], 1
    %246 = vsyncpa [#allocation6], 1
    %247 = vsyncpa [#allocation4], 1

</llo_original>
